<compile_context>
chip_gen: v7x
topology: tpu7x:2x2x1
jax: 0.10.0
libtpu: 0.0.40
codegen_flags: <defaults>
</compile_context>

<pallas_src>
import functools

import jax
import jax.numpy as jnp
from jax.experimental import pallas as pl
from jax.experimental.pallas import tpu as pltpu


# Leave headroom under v7x's 64 MiB physical VMEM (v5e/v6e have 128 MiB).
_VMEM_LIMIT = 48 * 1024 * 1024


def _round_up(x, m):
    return ((x + m - 1) // m) * m


def _pick_tile(dim, prefs=(512, 256, 128)):
    """Largest MXU-friendly tile that divides `dim` (falls back to full dim)."""
    for p in prefs:
        if dim % p == 0:
            return p
    return dim


# ----------------------------------------------------------------------------
# Kernel 1: fold the adjacency through the basis composition coefficients.
#   A_fold[b] = sum_r comp[r, b] * A[r]          (f32 accumulate, bf16 out)
# ----------------------------------------------------------------------------
def _fold_adj_kernel(comp_ref, a_ref, out_ref, acc_ref):
    b = pl.program_id(0)
    r = pl.program_id(3)          # reduction axis (last in grid)

    @pl.when(r == 0)
    def _():
        acc_ref[...] = jnp.zeros_like(acc_ref)

    acc_ref[...] += comp_ref[r, b] * a_ref[0].astype(jnp.float32)

    @pl.when(r == pl.num_programs(3) - 1)
    def _():
        out_ref[0] = acc_ref[...].astype(out_ref.dtype)


def fold_adjacency(comp, adj, *, tm, tk):
    """comp:(R,B) f32, adj:(R,N,N) bf16 -> (B,N,N) bf16."""
    R, N, _ = adj.shape
    B = comp.shape[1]
    return pl.pallas_call(
        _fold_adj_kernel,
        out_shape=jax.ShapeDtypeStruct((B, N, N), jnp.bfloat16),
        grid_spec=pltpu.PrefetchScalarGridSpec(
            num_scalar_prefetch=0,
            grid=(B, N // tm, N // tk, R),
            in_specs=[
                # comp lives in SMEM; read as scalars comp_ref[r, b].
                pl.BlockSpec(memory_space=pltpu.MemorySpace.SMEM),
                pl.BlockSpec((1, tm, tk), lambda b, m, k, r: (r, m, k)),
            ],
            out_specs=pl.BlockSpec((1, tm, tk), lambda b, m, k, r: (b, m, k)),
            scratch_shapes=[pltpu.VMEM((tm, tk), jnp.float32)],
        ),
        compiler_params=pltpu.CompilerParams(
            dimension_semantics=("parallel", "parallel", "parallel",
                                 "arbitrary"),
            vmem_limit_bytes=_VMEM_LIMIT),
    )(comp, adj)


# ----------------------------------------------------------------------------
# Kernel 2: per-basis transformed features HV[b] = H @ V_b   (bf16 out)
# ----------------------------------------------------------------------------
def _basis_hv_kernel(h_ref, v_ref, out_ref):
    out_ref[0] = jnp.dot(h_ref[...], v_ref[0],
                         preferred_element_type=jnp.float32
                         ).astype(out_ref.dtype)


def basis_transform(h, bases, *, tk):
    """h:(N,D) bf16, bases:(B,D,D) bf16 -> (B,N,D) bf16."""
    N, D = h.shape
    B = bases.shape[0]
    return pl.pallas_call(
        _basis_hv_kernel,
        out_shape=jax.ShapeDtypeStruct((B, N, D), jnp.bfloat16),
        grid_spec=pltpu.PrefetchScalarGridSpec(
            num_scalar_prefetch=0,
            grid=(B, N // tk),
            in_specs=[
                pl.BlockSpec((tk, D), lambda b, k: (k, 0)),
                pl.BlockSpec((1, D, D), lambda b, k: (b, 0, 0)),
            ],
            out_specs=pl.BlockSpec((1, tk, D), lambda b, k: (b, k, 0)),
        ),
        compiler_params=pltpu.CompilerParams(
            dimension_semantics=("parallel", "parallel"),
            vmem_limit_bytes=_VMEM_LIMIT),
    )(h, bases)


# ----------------------------------------------------------------------------
# Kernel 3: RGCN aggregation (tiled over dst nodes; reduction over basis and
# src-node tiles; resident f32 scratch accumulator, single store per dst tile).
#   out[m] = sum_{b,k} A_fold[b, m, k] @ HV[b, k] + H[m] @ W_loop + bias
# ----------------------------------------------------------------------------
def _rgcn_agg_kernel(a_ref, hv_ref, h_ref, wloop_ref, bias_ref, out_ref,
                     acc_ref, *, apply_relu):
    b = pl.program_id(1)
    k = pl.program_id(2)

    # Initialize accumulator with self-loop message + bias on the first step.
    @pl.when((b == 0) & (k == 0))
    def _():
        acc_ref[...] = (
            jnp.dot(h_ref[...], wloop_ref[...],
                    preferred_element_type=jnp.float32)
            + bias_ref[...])

    acc_ref[...] += jnp.dot(a_ref[0], hv_ref[0],
                            preferred_element_type=jnp.float32)

    @pl.when((b == pl.num_programs(1) - 1) & (k == pl.num_programs(2) - 1))
    def _():
        res = acc_ref[...]
        if apply_relu:
            res = jnp.maximum(res, 0.0)
        out_ref[...] = res.astype(out_ref.dtype)


def rgcn_aggregate(a_fold, hv, h, w_loop, bias, *, apply_relu, tm, tk):
    """a_fold:(B,N,N) bf16, hv:(B,N,D) bf16, h:(N,D) bf16 -> (N,D) f32."""
    N, D = h.shape
    B = a_fold.shape[0]
    kernel = functools.partial(_rgcn_agg_kernel, apply_relu=apply_relu)
    # NOTE: A is the only streamed operand; if its DMA were exposed at scale,
    # pipeline_mode=pl.Buffered(3) on its BlockSpec is the next knob.
    return pl.pallas_call(
        kernel,
        out_shape=jax.ShapeDtypeStruct((N, D), jnp.float32),
        grid_spec=pltpu.PrefetchScalarGridSpec(
            num_scalar_prefetch=0,
            grid=(N // tm, B, N // tk),            # reduction axes last
            in_specs=[
                pl.BlockSpec((1, tm, tk), lambda m, b, k: (b, m, k)),  # A_fold
                pl.BlockSpec((1, tk, D), lambda m, b, k: (b, k, 0)),   # HV
                pl.BlockSpec((tm, D), lambda m, b, k: (m, 0)),         # H
                pl.BlockSpec((D, D), lambda m, b, k: (0, 0)),          # W_loop
                pl.BlockSpec((1, D), lambda m, b, k: (0, 0)),          # bias
            ],
            out_specs=pl.BlockSpec((tm, D), lambda m, b, k: (m, 0)),
            scratch_shapes=[pltpu.VMEM((tm, D), jnp.float32)],
        ),
        compiler_params=pltpu.CompilerParams(
            dimension_semantics=("parallel", "arbitrary", "arbitrary"),
            vmem_limit_bytes=_VMEM_LIMIT),
    )(a_fold, hv, h, w_loop, bias)


# ----------------------------------------------------------------------------
# Kernel 4: DistMult scoring, tiled over triplets, lane-dense (1, T) output.
#   score[t] = sum_d s[t,d] * r[t,d] * o[t,d]
# ----------------------------------------------------------------------------
def _distmult_kernel(s_ref, r_ref, o_ref, out_ref):
    prod = s_ref[...] * r_ref[...] * o_ref[...]
    out_ref[...] = jnp.sum(prod, axis=1)[None, :]


def distmult_score(s_emb, r_emb, o_emb):
    T, D = s_emb.shape
    t_pad = _round_up(T, 128)
    tile_t = 512 if t_pad % 512 == 0 else (256 if t_pad % 256 == 0 else 128)
    if t_pad != T:
        pad = ((0, t_pad - T), (0, 0))
        s_emb = jnp.pad(s_emb, pad)
        r_emb = jnp.pad(r_emb, pad)
        o_emb = jnp.pad(o_emb, pad)
    out = pl.pallas_call(
        _distmult_kernel,
        out_shape=jax.ShapeDtypeStruct((1, t_pad), jnp.float32),
        grid_spec=pltpu.PrefetchScalarGridSpec(
            num_scalar_prefetch=0,
            grid=(t_pad // tile_t,),
            in_specs=[
                pl.BlockSpec((tile_t, D), lambda t: (t, 0)),
                pl.BlockSpec((tile_t, D), lambda t: (t, 0)),
                pl.BlockSpec((tile_t, D), lambda t: (t, 0)),
            ],
            out_specs=pl.BlockSpec((1, tile_t), lambda t: (0, t)),
        ),
        compiler_params=pltpu.CompilerParams(
            dimension_semantics=("parallel",),
            vmem_limit_bytes=_VMEM_LIMIT),
    )(s_emb, r_emb, o_emb)
    return out[0, :T]


# ----------------------------------------------------------------------------
# LinkPredict (JAX-side parameter container + forward glue)
# ----------------------------------------------------------------------------
class LinkPredictPallas:
    def __init__(self, key, *, num_nodes, h_dim, num_rels, num_bases,
                 num_hidden_layers):
        self.num_nodes = num_nodes
        self.h_dim = h_dim
        self.num_rels = num_rels
        self.total_rels = num_rels * 2            # fwd + inverse relations
        self.num_bases = num_bases if num_bases > 0 else self.total_rels
        self.num_hidden_layers = num_hidden_layers

        k_emb, k_wrel, k_layers = jax.random.split(key, 3)

        # EmbeddingLayer lookup table (num_nodes, h_dim).
        self.embedding = jax.random.normal(
            k_emb, (num_nodes, h_dim), jnp.float32)

        # DistMult relation weights (num_rels, h_dim), xavier-uniform (relu gain).
        bound = jnp.sqrt(6.0 / (num_rels + h_dim)) * jnp.sqrt(2.0)
        self.w_relation = jax.random.uniform(
            k_wrel, (num_rels, h_dim), jnp.float32, -bound, bound)

        # Per-layer RGCN basis-decomposition parameters.
        self.layers = []
        for idx in range(num_hidden_layers):
            kl = jax.random.fold_in(k_layers, idx)
            kb, kc, ks, kbias = jax.random.split(kl, 4)
            scale = 1.0 / jnp.sqrt(h_dim)
            bases = jax.random.normal(
                kb, (self.num_bases, h_dim, h_dim), jnp.float32) * scale
            comp = jax.random.normal(
                kc, (self.total_rels, self.num_bases), jnp.float32) * scale
            w_loop = jax.random.normal(
                ks, (h_dim, h_dim), jnp.float32) * scale
            bias = jax.random.normal(kbias, (1, h_dim), jnp.float32) * 0.01
            self.layers.append((bases, comp, w_loop, bias))

    def forward(self, node_ids, adj):
        """RGCN encoder forward.  node_ids:(N,) int32, adj:(R,N,N) f32."""
        N = node_ids.shape[0]
        tm = _pick_tile(N)
        tk = _pick_tile(N)

        # Embedding lookup (data-dependent gather -> JAX glue).
        h = jnp.take(self.embedding, node_ids, axis=0)          # (N, D) f32
        adj_bf = adj.astype(jnp.bfloat16)                       # stream in bf16

        for idx, (bases, comp, w_loop, bias) in enumerate(self.layers):
            h_bf = h.astype(jnp.bfloat16)
            # HV[b] = H @ V_b   (num_bases small matmuls instead of R).
            hv = basis_transform(h_bf, bases.astype(jnp.bfloat16), tk=tk)
            # A_fold[b] = sum_r comp[r, b] * A_r   (folded basis composition).
            a_fold = fold_adjacency(comp, adj_bf, tm=tm, tk=tk)
            act = idx < self.num_hidden_layers - 1   # ReLU on all but last
            h = rgcn_aggregate(a_fold, hv, h_bf,
                               w_loop.astype(jnp.bfloat16), bias,
                               apply_relu=act, tm=tm, tk=tk)
        return h

    def calc_score(self, embedding, triplets):
        s = jnp.take(embedding, triplets[:, 0], axis=0)
        r = jnp.take(self.w_relation, triplets[:, 1], axis=0)
        o = jnp.take(embedding, triplets[:, 2], axis=0)
        return distmult_score(s, r, o)


# ----------------------------------------------------------------------------
# Pure-JAX reference (replicates the kernels' bf16 cast points, f32 accumulate)
# ----------------------------------------------------------------------------
def _reference_forward(model, node_ids, adj):
    hi = jax.lax.Precision.HIGHEST
    h = jnp.take(model.embedding, node_ids, axis=0)
    adj_f = adj.astype(jnp.bfloat16).astype(jnp.float32)
    for idx, (bases, comp, w_loop, bias) in enumerate(model.layers):
        h_f = h.astype(jnp.bfloat16).astype(jnp.float32)
        v_f = bases.astype(jnp.bfloat16).astype(jnp.float32)
        wl_f = w_loop.astype(jnp.bfloat16).astype(jnp.float32)
        hv = jnp.einsum('nd,bde->bne', h_f, v_f, precision=hi)
        hv = hv.astype(jnp.bfloat16).astype(jnp.float32)
        a_fold = jnp.einsum('rb,rmn->bmn', comp, adj_f, precision=hi)
        a_fold = a_fold.astype(jnp.bfloat16).astype(jnp.float32)
        out = (jnp.einsum('bmn,bnd->md', a_fold, hv, precision=hi)
               + jnp.dot(h_f, wl_f, precision=hi) + bias)
        if idx < model.num_hidden_layers - 1:
            out = jnp.maximum(out, 0.0)
        h = out
    return h


if __name__ == "__main__":
    key = jax.random.PRNGKey(0)
    N, D = 384, 128        # num_nodes, hidden dim (MXU/lane aligned, 3x3 tiles)
    NUM_RELS = 3           # base relations (doubled inside for inverse edges)
    NUM_BASES = 2
    NUM_LAYERS = 2
    T = 300                # number of scored triplets (padded to 384 inside)

    k_adj, k_tri, k_model = jax.random.split(key, 3)

    model = LinkPredictPallas(
        k_model, num_nodes=N, h_dim=D, num_rels=NUM_RELS,
        num_bases=NUM_BASES, num_hidden_layers=NUM_LAYERS)

    # Sampled subgraph: node ids + dense normalized relational adjacency.
    node_ids = jnp.arange(N, dtype=jnp.int32)
    R = NUM_RELS * 2
    raw = (jax.random.uniform(k_adj, (R, N, N)) < 0.3).astype(jnp.float32)
    in_deg = jnp.clip(raw.sum(axis=(0, 2)), 1.0, None)       # (N,) per-dst
    adj = raw / in_deg[None, :, None]                         # edge norm

    # Triplets (s, rel, o) for DistMult scoring.
    s_idx = jax.random.randint(jax.random.fold_in(k_tri, 0), (T,), 0, N)
    r_idx = jax.random.randint(jax.random.fold_in(k_tri, 1), (T,), 0, NUM_RELS)
    o_idx = jax.random.randint(jax.random.fold_in(k_tri, 2), (T,), 0, N)
    triplets = jnp.stack([s_idx, r_idx, o_idx], axis=1).astype(jnp.int32)

    # forward(g) -> node embeddings; calc_score -> DistMult logits.
    embedding = model.forward(node_ids, adj)
    score = model.calc_score(embedding, triplets)
    jax.block_until_ready((embedding, score))
    assert embedding.shape == (N, D) and score.shape == (T,)

    # Correctness check against a pure-JAX reference.
    emb_ref = _reference_forward(model, node_ids, adj)
    emb_scale = float(jnp.max(jnp.abs(emb_ref))) + 1e-6
    emb_err = float(jnp.max(jnp.abs(embedding - emb_ref)))
    assert emb_err <= 2e-2 * emb_scale, f"embedding mismatch: {emb_err}"

    s = jnp.take(embedding, triplets[:, 0], axis=0)
    r = jnp.take(model.w_relation, triplets[:, 1], axis=0)
    o = jnp.take(embedding, triplets[:, 2], axis=0)
    score_ref = jnp.sum(s * r * o, axis=1)
    sc_scale = float(jnp.max(jnp.abs(score_ref))) + 1e-6
    sc_err = float(jnp.max(jnp.abs(score - score_ref)))
    assert sc_err <= 1e-3 * sc_scale, f"score mismatch: {sc_err}"

    print("KERNEL_OK")
</pallas_src>

<mosaic_0001>
module attributes {stable_mosaic.version = 11 : i64} {
  func.func @_basis_hv_kernel(%arg0: i32, %arg1: i32, %arg2: memref<128x128xbf16, #tpu.memory_space<vmem>>, %arg3: memref<1x128x128xbf16, #tpu.memory_space<vmem>>, %arg4: memref<1x128x128xbf16, #tpu.memory_space<vmem>>) attributes {dimension_semantics = [#tpu.dimension_semantics<parallel>, #tpu.dimension_semantics<parallel>], iteration_bounds = array<i64: 2, 3>, scalar_prefetch = 0 : i64, scratch_operands = 0 : i64, tpu.core_type = #tpu.core_type<tc>, window_params = [{transform_indices = @transform_0, window_bounds = array<i64: 128, 128>}, {transform_indices = @transform_1, window_bounds = array<i64: 1, 128, 128>}, {transform_indices = @transform_2, window_bounds = array<i64: 1, 128, 128>}]} {
    %c0 = arith.constant 0 : index
    %c0_0 = arith.constant 0 : index
    %0 = vector.load %arg2[%c0, %c0_0] : memref<128x128xbf16, #tpu.memory_space<vmem>>, vector<128x128xbf16>
    %c0_1 = arith.constant 0 : index
    %c0_2 = arith.constant 0 : index
    %c0_3 = arith.constant 0 : index
    %1 = vector.load %arg3[%c0_1, %c0_2, %c0_3] : memref<1x128x128xbf16, #tpu.memory_space<vmem>>, vector<1x128x128xbf16>
    %2 = vector.shape_cast %1 : vector<1x128x128xbf16> to vector<128x128xbf16>
    %cst = arith.constant dense<0.000000e+00> : vector<128x128xf32>
    %3 = tpu.matmul %0, %2, %cst {dimension_numbers = #tpu.dot_dimension_numbers<[1], [0], [0], [1], [0, 0, 1, 1], [], []>} : vector<128x128xbf16>, vector<128x128xbf16>, vector<128x128xf32> -> vector<128x128xf32>
    %4 = arith.truncf %3 : vector<128x128xf32> to vector<128x128xbf16>
    %c0_4 = arith.constant 0 : index
    %c0_5 = arith.constant 0 : index
    %c0_6 = arith.constant 0 : index
    %5 = vector.load %arg4[%c0_4, %c0_5, %c0_6] : memref<1x128x128xbf16, #tpu.memory_space<vmem>>, vector<1x128x128xbf16>
    %6 = vector.shape_cast %5 : vector<1x128x128xbf16> to vector<128x128xbf16>
    %7 = vector.shape_cast %4 : vector<128x128xbf16> to vector<1x128x128xbf16>
    tpu.vector_store %arg4[%c0_4, %c0_5, %c0_6], %7 {strides = array<i32>} : memref<1x128x128xbf16, #tpu.memory_space<vmem>>, vector<1x128x128xbf16>,
    return
  }
  func.func @transform_0(%arg0: i32, %arg1: i32) -> (i32, i32) {
    %c0_i32 = arith.constant 0 : i32
    %c0_i32_0 = arith.constant 0 : i32
    return %arg1, %c0_i32 : i32, i32
  }
  func.func @transform_1(%arg0: i32, %arg1: i32) -> (i32, i32, i32) {
    %c0_i32 = arith.constant 0 : i32
    %c0_i32_0 = arith.constant 0 : i32
    %c0_i32_1 = arith.constant 0 : i32
    return %arg0, %c0_i32, %c0_i32_0 : i32, i32, i32
  }
  func.func @transform_2(%arg0: i32, %arg1: i32) -> (i32, i32, i32) {
    %c0_i32 = arith.constant 0 : i32
    %c0_i32_0 = arith.constant 0 : i32
    return %arg0, %arg1, %c0_i32 : i32, i32, i32
  }
}

</mosaic_0001>

<llo_original>
// kernel: tpu_custom_call.1
$region0: #{tpu_custom_call.1}
  #allocation0 [shape = 'u32[]', space=smem, size = 0x4, offset = 0x4, fixed_abs, tag = 'smem constant byte address 0x4 - core index']
  #allocation1 [shape = 'u32[144,128]{1,0:T(1,128)}', space=vmem, size = 0x12000, scoped, tag = 'internal scratch']
  %s0 = inlined_call_operand.hbm [shape: bf16[384,128], index: 0, kind: input, shape index: {}]
  %s1 = inlined_call_operand.hbm [shape: bf16[2,128,128], index: 1, kind: input, shape index: {}]
  %s2 = inlined_call_operand.hbm [shape: bf16[2,384,128], index: 2, kind: output, shape index: {}]
  %s3 = sld [smem:[#allocation0]]
  $region49: #{tpu_custom_call.1} parent=0
    _
  %s5 = ssub.s32 1, %s3
  %s6 = scalar_select 0, %s5, %s3
  $region1: #{tpu_custom_call.1} parent=0
    #allocation2 [shape = 'u8[65536]{0}', space=vmem, size = 0x10000, scoped, tag = 'input window, operand 0']
    #allocation3 [shape = 's32[2]{0}', space=sflag, size = 0x8, scoped, tag = 'scoped memory for tpu_custom_call.1']
    #allocation4 [shape = 's32[2]{0}', space=sflag, size = 0x8, scoped, tag = 'scoped memory for tpu_custom_call.1']
    #allocation5 [shape = 'u8[65536]{0}', space=vmem, size = 0x10000, scoped, tag = 'input window, operand 1']
    #allocation6 [shape = 's32[2]{0}', space=sflag, size = 0x8, scoped, tag = 'scoped memory for tpu_custom_call.1']
    #allocation7 [shape = 'u8[65536]{0}', space=vmem, size = 0x10000, scoped, tag = 'output window, operand 0']
    %7 = vsyncpa [#allocation3], 0
    %s8 = scalar_lea.sflag [#allocation3], 1
    %9 = vsyncpa %s8, 0
    %10 = vsyncpa [#allocation6], 0
    %s11 = scalar_lea.sflag [#allocation6], 1
    %12 = vsyncpa %s11, 0
    %13 = vsyncpa [#allocation4], 0
    %s14 = scalar_lea.sflag [#allocation4], 1
    %15 = vsyncpa %s14, 0
    loop: start=0, step=1, limit=8
    $region2: #{tpu_custom_call.1} parent=1 // loop_pre_header
      _
    $region3: #{tpu_custom_call.1} parent=1 // loop_header
      %s17 = sphi 0, %s21
      %p18 = scmp.ge.s32.totalorder %s17, 8
      %s24 = sphi 0, %s36
      %s25 = sphi 0, %s32
      %s26 = sphi 0, %s24
      %s27 = sphi 0, %s25
      %s28 = sphi 0, %s26
      %s29 = sphi 0, %s27
      %s39 = sphi 0, %s41
      %s42 = sphi 0, %s39
      %s43 = sphi 0, %s42
      %s59 = sphi 0, %s43
      %s65 = sphi 0, %s67
      %s68 = sphi 0, %s65
      %s69 = sphi 0, %s68
      %s85 = sphi 0, %s69
      %s93 = sphi 0, %s95
      %s96 = sphi 0, %s93
      %s97 = sphi 0, %s96
      %s113 = sphi 0, %s97
    $region4: #{tpu_custom_call.1} parent=1 // loop_header_branch
      %20 = sbr.rel (%p18) target = $region8
    $region5: #{tpu_custom_call.1} parent=1 // loop_body
      %s22 = ssub.s32 %s17, 1
      %s23 = ssub.s32 %s17, 2
      %s30 = sadd.s32 1, %s25
      %p31 = scmp.ge.s32.totalorder %s30, 3
      %s32 = scalar_select %p31, 0, %s30
      %s33 = sadd.s32 1, %s24
      %s34 = scalar_select %p31, %s33, %s24
      %p35 = scmp.ge.s32.totalorder %s34, 2
      %s36 = scalar_select %p35, 0, %s34
      %s37 = ssub.s32 %s25, %s32
      %p38 = scmp.eq.s32.totalorder %s37, 0
      %s40 = sadd.s32 %s39, 1
      %s41 = scalar_select %p38, %s39, %s40
      %p44 = pneg %p38
      %p45 = scmp.eq.s32.totalorder %s17, 5
      %p46 = por %p44, %p45
      %p47 = scmp.ne.s32.totalorder %s39, %s42
      %p48 = scmp.eq.s32.totalorder %s17, 0
      %p49 = por %p47, %p48
      %p50 = scmp.ne.s32.totalorder %s39, %s42
      %p51 = scmp.eq.s32.totalorder %s22, 5
      %p52 = por %p50, %p51
      %p53 = scmp.ne.s32.totalorder %s42, %s43
      %p54 = scmp.eq.s32.totalorder %s22, 0
      %p55 = por %p53, %p54
      %p56 = scmp.ne.s32.totalorder %s42, %s43
      %p57 = scmp.eq.s32.totalorder %s23, 5
      %p58 = por %p56, %p57
      %p60 = scmp.ne.s32.totalorder %s43, %s59
      %p61 = scmp.eq.s32.totalorder %s23, 0
      %p62 = por %p60, %p61
      %s63 = ssub.s32 %s24, %s36
      %p64 = scmp.eq.s32.totalorder %s63, 0
      %s66 = sadd.s32 %s65, 1
      %s67 = scalar_select %p64, %s65, %s66
      %p70 = pneg %p64
      %p71 = scmp.eq.s32.totalorder %s17, 5
      %p72 = por %p70, %p71
      %p73 = scmp.ne.s32.totalorder %s65, %s68
      %p74 = scmp.eq.s32.totalorder %s17, 0
      %p75 = por %p73, %p74
      %p76 = scmp.ne.s32.totalorder %s65, %s68
      %p77 = scmp.eq.s32.totalorder %s22, 5
      %p78 = por %p76, %p77
      %p79 = scmp.ne.s32.totalorder %s68, %s69
      %p80 = scmp.eq.s32.totalorder %s22, 0
      %p81 = por %p79, %p80
      %p82 = scmp.ne.s32.totalorder %s68, %s69
      %p83 = scmp.eq.s32.totalorder %s23, 5
      %p84 = por %p82, %p83
      %p86 = scmp.ne.s32.totalorder %s69, %s85
      %p87 = scmp.eq.s32.totalorder %s23, 0
      %p88 = por %p86, %p87
      %s89 = ssub.s32 %s24, %s36
      %s90 = ssub.s32 %s25, %s32
      %s91 = sor.u32 %s89, %s90
      %p92 = scmp.eq.s32.totalorder %s91, 0
      %s94 = sadd.s32 %s93, 1
      %s95 = scalar_select %p92, %s93, %s94
      %p98 = pneg %p92
      %p99 = scmp.eq.s32.totalorder %s17, 5
      %p100 = por %p98, %p99
      %p101 = scmp.ne.s32.totalorder %s93, %s96
      %p102 = scmp.eq.s32.totalorder %s17, 0
      %p103 = por %p101, %p102
      %p104 = scmp.ne.s32.totalorder %s93, %s96
      %p105 = scmp.eq.s32.totalorder %s22, 5
      %p106 = por %p104, %p105
      %p107 = scmp.ne.s32.totalorder %s96, %s97
      %p108 = scmp.eq.s32.totalorder %s22, 0
      %p109 = por %p107, %p108
      %p110 = scmp.ne.s32.totalorder %s96, %s97
      %p111 = scmp.eq.s32.totalorder %s23, 5
      %p112 = por %p110, %p111
      %p114 = scmp.ne.s32.totalorder %s97, %s113
      %p115 = scmp.eq.s32.totalorder %s23, 0
      %p116 = por %p114, %p115
      %p117 = scmp.le.s32.totalorder 1, %s17
      %p118 = scmp.lt.s32.totalorder %s17, 7
      %p119 = pnand %p117, %p118
      %p120 = pneg %p119
      // Predicated region
      $region9: #{tpu_custom_call.1} parent=5 // pred_check
        _
      $region10: #{tpu_custom_call.1} parent=5 // pred_check_branch
        %122 = sbr.rel (%p119) target = $region12
      $region11: #{tpu_custom_call.1} parent=5 // pred_region
        %s123 = ssub.s32 %s17, 1
      $region12: #{tpu_custom_call.1} parent=5 // pred_fallthru
        _
      %p124 = scmp.lt.s32.totalorder %s17, 6
      // Predicated region
      $region13: #{tpu_custom_call.1} parent=5 // pred_check
        %p125 = pneg %p124
      $region14: #{tpu_custom_call.1} parent=5 // pred_check_branch
        %127 = sbr.rel (%p125) target = $region16
      $region15: #{tpu_custom_call.1} parent=5 // pred_region
        // Predicated region
        $region17: #{tpu_custom_call.1} parent=15 // pred_check
          %p128 = pneg %p49
        $region18: #{tpu_custom_call.1} parent=15 // pred_check_branch
          %130 = sbr.rel (%p128) target = $region20
        $region19: #{tpu_custom_call.1} parent=15 // pred_region
          %s131 = sand.u32 %s39, 1
          %s132 = scalar_lea.sflag [#allocation3], %s131
          %s133 = sand.u32 %s39, 1
          %s134 = smul.addr %s133, 64
          %s135 = scalar_lea.vmem [#allocation2], %s134
          %s136 = smul.u32 16, %s25
          %s138 = ssub.s32 1024, 1024
          %139 = vsyncadd %s132, %s138
          %s140 = smul.addr %s136, 64
          %s141 = scalar_lea.hbm %s0, %s140
          %s142 = sshll.u32 %s135, 4
          %s143 = int_to_ptr.vmem [resolvable:$true] %s142
          %148 = dma.hbm_to_vmem [thread:$0]  %s141, 1024, %s143, %s132, 64, 64, 4
        $region20: #{tpu_custom_call.1} parent=15 // pred_fallthru
          _
        // Predicated region
        $region21: #{tpu_custom_call.1} parent=15 // pred_check
          %p149 = pneg %p75
        $region22: #{tpu_custom_call.1} parent=15 // pred_check_branch
          %151 = sbr.rel (%p149) target = $region24
        $region23: #{tpu_custom_call.1} parent=15 // pred_region
          %s152 = sand.u32 %s65, 1
          %s153 = scalar_lea.sflag [#allocation6], %s152
          %s154 = sand.u32 %s65, 1
          %s155 = smul.addr %s154, 64
          %s156 = scalar_lea.vmem [#allocation5], %s155
          %s158 = ssub.s32 1024, 1024
          %159 = vsyncadd %s153, %s158
          %s160 = smul.addr %s24, 16
          %s161 = smul.addr %s160, 64
          %s162 = scalar_lea.hbm %s1, %s161
          %s163 = sshll.u32 %s156, 4
          %s164 = int_to_ptr.vmem [resolvable:$true] %s163
          %169 = dma.hbm_to_vmem [thread:$0]  %s162, 1024, %s164, %s153, 64, 64, 4
        $region24: #{tpu_custom_call.1} parent=15 // pred_fallthru
          _
      $region16: #{tpu_custom_call.1} parent=5 // pred_fallthru
        _
      %p170 = scmp.le.s32.totalorder 1, %s17
      %p171 = scmp.lt.s32.totalorder %s17, 7
      %p172 = pnand %p170, %p171
      %p173 = pneg %p172
      // Predicated region
      $region25: #{tpu_custom_call.1} parent=5 // pred_check
        _
      $region26: #{tpu_custom_call.1} parent=5 // pred_check_branch
        %175 = sbr.rel (%p172) target = $region28
      $region27: #{tpu_custom_call.1} parent=5 // pred_region
        %s176 = ssub.s32 %s17, 1
        %s177 = sand.u32 %s42, 1
        %s178 = scalar_lea.sflag [#allocation3], %s177
        %s179 = sand.u32 %s42, 1
        %s180 = smul.addr %s179, 64
        %s181 = scalar_lea.vmem [#allocation2], %s180
        // Predicated region
        $region29: #{tpu_custom_call.1} parent=27 // pred_check
          %p182 = pneg %p55
        $region30: #{tpu_custom_call.1} parent=27 // pred_check_branch
          %184 = sbr.rel (%p182) target = $region32
        $region31: #{tpu_custom_call.1} parent=27 // pred_region
          %185 = dma.done %s178, 1024
        $region32: #{tpu_custom_call.1} parent=27 // pred_fallthru
          _
        %s186 = sand.u32 %s68, 1
        %s187 = scalar_lea.sflag [#allocation6], %s186
        %s188 = sand.u32 %s68, 1
        %s189 = smul.addr %s188, 64
        %s190 = scalar_lea.vmem [#allocation5], %s189
        // Predicated region
        $region33: #{tpu_custom_call.1} parent=27 // pred_check
          %p191 = pneg %p81
        $region34: #{tpu_custom_call.1} parent=27 // pred_check_branch
          %193 = sbr.rel (%p191) target = $region36
        $region35: #{tpu_custom_call.1} parent=27 // pred_region
          %194 = dma.done %s187, 1024
        $region36: #{tpu_custom_call.1} parent=27 // pred_fallthru
          _
        %s195 = sand.u32 %s42, 1
        %s196 = scalar_lea.sflag [#allocation3], %s195
        %s197 = sand.u32 %s42, 1
        %s198 = smul.addr %s197, 64
        %s199 = scalar_lea.vmem [#allocation2], %s198
        %p200 = pneg %p55
        %p201 = pneg %p52
        %s202 = sand.u32 %s68, 1
        %s203 = scalar_lea.sflag [#allocation6], %s202
        %s204 = sand.u32 %s68, 1
        %s205 = smul.addr %s204, 64
        %s206 = scalar_lea.vmem [#allocation5], %s205
        %p207 = pneg %p81
        %p208 = pneg %p78
        %p209 = pneg %p109
        %p210 = pneg %p106
        %s211 = sand.u32 %s96, 1
        %s212 = scalar_lea.sflag [#allocation4], %s211
        %s213 = sand.u32 %s96, 1
        %s214 = smul.addr %s213, 64
        %s215 = scalar_lea.vmem [#allocation7], %s214
        %s216 = smul.u32 16, %s27
        %s217 = smul.u32 16, %s27
        %v219 = vld [vmem:[%s181] sm:$0xf]
        %v220 = vld [vmem:[%s181 + $0x4] sm:$0xf]
        %v221 = vld [vmem:[%s181 + $0x8] sm:$0xf]
        %v222 = vld [vmem:[%s181 + $0xc] sm:$0xf]
        %v223 = vld [vmem:[%s181 + $0x10] sm:$0xf]
        %v224 = vld [vmem:[%s181 + $0x14] sm:$0xf]
        %v225 = vld [vmem:[%s181 + $0x18] sm:$0xf]
        %v226 = vld [vmem:[%s181 + $0x1c] sm:$0xf]
        %v227 = vld [vmem:[%s181 + $0x20] sm:$0xf]
        %v228 = vld [vmem:[%s181 + $0x24] sm:$0xf]
        %v229 = vld [vmem:[%s181 + $0x28] sm:$0xf]
        %v230 = vld [vmem:[%s181 + $0x2c] sm:$0xf]
        %v231 = vld [vmem:[%s181 + $0x30] sm:$0xf]
        %v232 = vld [vmem:[%s181 + $0x34] sm:$0xf]
        %v233 = vld [vmem:[%s181 + $0x38] sm:$0xf]
        %v234 = vld [vmem:[%s181 + $0x3c] sm:$0xf]
        %v235 = vld [vmem:[%s190] sm:$0xf]
        %v236 = vld [vmem:[%s190 + $0x4] sm:$0xf]
        %v237 = vld [vmem:[%s190 + $0x8] sm:$0xf]
        %v238 = vld [vmem:[%s190 + $0xc] sm:$0xf]
        %v239 = vld [vmem:[%s190 + $0x10] sm:$0xf]
        %v240 = vld [vmem:[%s190 + $0x14] sm:$0xf]
        %v241 = vld [vmem:[%s190 + $0x18] sm:$0xf]
        %v242 = vld [vmem:[%s190 + $0x1c] sm:$0xf]
        %v243 = vld [vmem:[%s190 + $0x20] sm:$0xf]
        %v244 = vld [vmem:[%s190 + $0x24] sm:$0xf]
        %v245 = vld [vmem:[%s190 + $0x28] sm:$0xf]
        %v246 = vld [vmem:[%s190 + $0x2c] sm:$0xf]
        %v247 = vld [vmem:[%s190 + $0x30] sm:$0xf]
        %v248 = vld [vmem:[%s190 + $0x34] sm:$0xf]
        %v249 = vld [vmem:[%s190 + $0x38] sm:$0xf]
        %v250 = vld [vmem:[%s190 + $0x3c] sm:$0xf]
        %v267 = vunpack.c.l.b16 %v219
        %v268 = vunpack.c.l.b16 %v220
        %v269 = vunpack.c.l.b16 %v221
        %v270 = vunpack.c.l.b16 %v222
        %v271 = vunpack.c.l.b16 %v223
        %v272 = vunpack.c.l.b16 %v224
        %v273 = vunpack.c.l.b16 %v225
        %v274 = vunpack.c.l.b16 %v226
        %v275 = vunpack.c.l.b16 %v227
        %v276 = vunpack.c.l.b16 %v228
        %v277 = vunpack.c.l.b16 %v229
        %v278 = vunpack.c.l.b16 %v230
        %v279 = vunpack.c.l.b16 %v231
        %v280 = vunpack.c.l.b16 %v232
        %v281 = vunpack.c.l.b16 %v233
        %v282 = vunpack.c.l.b16 %v234
        %v283 = vpack.c.b16 %v268, %v267
        %v284 = vpack.c.b16 %v270, %v269
        %v285 = vpack.c.b16 %v272, %v271
        %v286 = vpack.c.b16 %v274, %v273
        %v287 = vpack.c.b16 %v276, %v275
        %v288 = vpack.c.b16 %v278, %v277
        %v289 = vpack.c.b16 %v280, %v279
        %v290 = vpack.c.b16 %v282, %v281
        %v315 = vunpack.c.l.b16 %v235
        %v316 = vunpack.c.l.b16 %v236
        %v317 = vunpack.c.l.b16 %v237
        %v318 = vunpack.c.l.b16 %v238
        %v319 = vunpack.c.l.b16 %v239
        %v320 = vunpack.c.l.b16 %v240
        %v321 = vunpack.c.l.b16 %v241
        %v322 = vunpack.c.l.b16 %v242
        %v323 = vunpack.c.l.b16 %v243
        %v324 = vunpack.c.l.b16 %v244
        %v325 = vunpack.c.l.b16 %v245
        %v326 = vunpack.c.l.b16 %v246
        %v327 = vunpack.c.l.b16 %v247
        %v328 = vunpack.c.l.b16 %v248
        %v329 = vunpack.c.l.b16 %v249
        %v330 = vunpack.c.l.b16 %v250
        %v331 = vpack.c.b16 %v316, %v315
        %v332 = vpack.c.b16 %v318, %v317
        %v333 = vpack.c.b16 %v320, %v319
        %v334 = vpack.c.b16 %v322, %v321
        %v335 = vpack.c.b16 %v324, %v323
        %v336 = vpack.c.b16 %v326, %v325
        %v337 = vpack.c.b16 %v328, %v327
        %v338 = vpack.c.b16 %v330, %v329
        %347 = vmatprep.subr.bf16.mxu0 0
        %348 = vmatpush1.bf16.msra.mxu0 %v331
        %349 = vmatprep.subr.bf16.mxu0 0
        %350 = vmatpush1.bf16.msra.mxu0 %v332
        %351 = vmatprep.subr.bf16.mxu0 0
        %352 = vmatpush1.bf16.msra.mxu0 %v333
        %353 = vmatprep.subr.bf16.mxu0 0
        %354 = vmatpush1.bf16.msra.mxu0 %v334
        %355 = vmatprep.subr.bf16.mxu0 0
        %356 = vmatpush1.bf16.msra.mxu0 %v335
        %357 = vmatprep.subr.bf16.mxu0 0
        %358 = vmatpush1.bf16.msra.mxu0 %v336
        %359 = vmatprep.subr.bf16.mxu0 0
        %360 = vmatpush1.bf16.msra.mxu0 %v337
        %361 = vmatprep.subr.bf16.mxu0 0
        %362 = vmatpush1.bf16.msra.mxu0 %v338
        %363 = vmatprep.subr.bf16.mxu0 0
        %364 = vmatpush1.bf16.msra.mxu0 0
        %365 = vmatprep.subr.bf16.mxu0 0
        %366 = vmatpush1.bf16.msra.mxu0 0
        %367 = vmatprep.subr.bf16.mxu0 0
        %368 = vmatpush1.bf16.msra.mxu0 0
        %369 = vmatprep.subr.bf16.mxu0 0
        %370 = vmatpush1.bf16.msra.mxu0 0
        %371 = vmatprep.subr.bf16.mxu0 0
        %372 = vmatpush1.bf16.msra.mxu0 0
        %373 = vmatprep.subr.bf16.mxu0 0
        %374 = vmatpush1.bf16.msra.mxu0 0
        %375 = vmatprep.subr.bf16.mxu0 0
        %376 = vmatpush1.bf16.msra.mxu0 0
        %377 = vmatprep.subr.bf16.mxu0 0
        %378 = vmatpush1.bf16.msra.mxu0 0
        %379 = vmatprep.mubr.bf16.mxu0 0
        %380 = vmatmul.mubr.bf16.gmra.mrb[0].mxu0 %v283
        %v381 = vpop.f32.mrb[0].mxu0
        %v382 = vadd.f32 0.0, %v381
        %v383 = vpop.f32.mrb[0].mxu0
        %v384 = vpop.f32.mrb[0].mxu0
        %v385 = vadd.f32 0.0, %v384
        %v386 = vpop.f32.mrb[0].mxu0
        %387 = vmatprep.mubr.bf16.mxu0 0
        %388 = vmatmul.mubr.bf16.gmra.mrb[0].mxu0 %v284
        %v389 = vpop.f32.mrb[0].mxu0
        %v390 = vadd.f32 0.0, %v389
        %v391 = vpop.f32.mrb[0].mxu0
        %v392 = vpop.f32.mrb[0].mxu0
        %v393 = vadd.f32 0.0, %v392
        %v394 = vpop.f32.mrb[0].mxu0
        %395 = vmatprep.mubr.bf16.mxu0 0
        %396 = vmatmul.mubr.bf16.gmra.mrb[0].mxu0 %v285
        %v397 = vpop.f32.mrb[0].mxu0
        %v398 = vadd.f32 0.0, %v397
        %v399 = vpop.f32.mrb[0].mxu0
        %v400 = vpop.f32.mrb[0].mxu0
        %v401 = vadd.f32 0.0, %v400
        %v402 = vpop.f32.mrb[0].mxu0
        %403 = vmatprep.mubr.bf16.mxu0 0
        %404 = vmatmul.mubr.bf16.gmra.mrb[0].mxu0 %v286
        %v405 = vpop.f32.mrb[0].mxu0
        %v406 = vadd.f32 0.0, %v405
        %v407 = vpop.f32.mrb[0].mxu0
        %v408 = vpop.f32.mrb[0].mxu0
        %v409 = vadd.f32 0.0, %v408
        %v410 = vpop.f32.mrb[0].mxu0
        %411 = vmatprep.mubr.bf16.mxu0 0
        %412 = vmatmul.mubr.bf16.gmra.mrb[0].mxu0 %v287
        %v413 = vpop.f32.mrb[0].mxu0
        %v414 = vadd.f32 0.0, %v413
        %v415 = vpop.f32.mrb[0].mxu0
        %v416 = vpop.f32.mrb[0].mxu0
        %v417 = vadd.f32 0.0, %v416
        %v418 = vpop.f32.mrb[0].mxu0
        %419 = vmatprep.mubr.bf16.mxu0 0
        %420 = vmatmul.mubr.bf16.gmra.mrb[0].mxu0 %v288
        %v421 = vpop.f32.mrb[0].mxu0
        %v422 = vadd.f32 0.0, %v421
        %v423 = vpop.f32.mrb[0].mxu0
        %v424 = vpop.f32.mrb[0].mxu0
        %v425 = vadd.f32 0.0, %v424
        %v426 = vpop.f32.mrb[0].mxu0
        %427 = vmatprep.mubr.bf16.mxu0 0
        %428 = vmatmul.mubr.bf16.gmra.mrb[0].mxu0 %v289
        %v429 = vpop.f32.mrb[0].mxu0
        %v430 = vadd.f32 0.0, %v429
        %v431 = vpop.f32.mrb[0].mxu0
        %v432 = vpop.f32.mrb[0].mxu0
        %v433 = vadd.f32 0.0, %v432
        %v434 = vpop.f32.mrb[0].mxu0
        %435 = vmatprep.mubr.bf16.mxu0 0
        %436 = vmatmul.mubr.bf16.gmra.mrb[0].mxu0 %v290
        %v437 = vpop.f32.mrb[0].mxu0
        %v438 = vadd.f32 0.0, %v437
        %v439 = vpop.f32.mrb[0].mxu0
        %v440 = vpop.f32.mrb[0].mxu0
        %v441 = vadd.f32 0.0, %v440
        %v442 = vpop.f32.mrb[0].mxu0
        %443 = vdwg.mxu0
        %v444 = vpack.c.bf16 %v385, %v382
        %v445 = vpack.c.bf16 %v393, %v390
        %v446 = vpack.c.bf16 %v401, %v398
        %v447 = vpack.c.bf16 %v409, %v406
        %v448 = vpack.c.bf16 %v417, %v414
        %v449 = vpack.c.bf16 %v425, %v422
        %v450 = vpack.c.bf16 %v433, %v430
        %v451 = vpack.c.bf16 %v441, %v438
        %v460 = vunpack.c.l.b16 %v444
        %v461 = vunpack.c.h.b16 %v444
        %v462 = vunpack.c.l.b16 %v445
        %v463 = vunpack.c.h.b16 %v445
        %v464 = vunpack.c.l.b16 %v446
        %v465 = vunpack.c.h.b16 %v446
        %v466 = vunpack.c.l.b16 %v447
        %v467 = vunpack.c.h.b16 %v447
        %v468 = vunpack.c.l.b16 %v448
        %v469 = vunpack.c.h.b16 %v448
        %v470 = vunpack.c.l.b16 %v449
        %v471 = vunpack.c.h.b16 %v449
        %v472 = vunpack.c.l.b16 %v450
        %v473 = vunpack.c.h.b16 %v450
        %v474 = vunpack.c.l.b16 %v451
        %v475 = vunpack.c.h.b16 %v451
        %v476 = vpack.c.b16 %v460, %v460
        %v477 = vpack.c.b16 %v461, %v461
        %v478 = vpack.c.b16 %v462, %v462
        %v479 = vpack.c.b16 %v463, %v463
        %v480 = vpack.c.b16 %v464, %v464
        %v481 = vpack.c.b16 %v465, %v465
        %v482 = vpack.c.b16 %v466, %v466
        %v483 = vpack.c.b16 %v467, %v467
        %v484 = vpack.c.b16 %v468, %v468
        %v485 = vpack.c.b16 %v469, %v469
        %v486 = vpack.c.b16 %v470, %v470
        %v487 = vpack.c.b16 %v471, %v471
        %v488 = vpack.c.b16 %v472, %v472
        %v489 = vpack.c.b16 %v473, %v473
        %v490 = vpack.c.b16 %v474, %v474
        %v491 = vpack.c.b16 %v475, %v475
        %508 = vst [vmem:[%s215] sm:$0xf] %v476
        %509 = vst [vmem:[%s215 + $0x4] sm:$0xf] %v477
        %510 = vst [vmem:[%s215 + $0x8] sm:$0xf] %v478
        %511 = vst [vmem:[%s215 + $0xc] sm:$0xf] %v479
        %512 = vst [vmem:[%s215 + $0x10] sm:$0xf] %v480
        %513 = vst [vmem:[%s215 + $0x14] sm:$0xf] %v481
        %514 = vst [vmem:[%s215 + $0x18] sm:$0xf] %v482
        %515 = vst [vmem:[%s215 + $0x1c] sm:$0xf] %v483
        %516 = vst [vmem:[%s215 + $0x20] sm:$0xf] %v484
        %517 = vst [vmem:[%s215 + $0x24] sm:$0xf] %v485
        %518 = vst [vmem:[%s215 + $0x28] sm:$0xf] %v486
        %519 = vst [vmem:[%s215 + $0x2c] sm:$0xf] %v487
        %520 = vst [vmem:[%s215 + $0x30] sm:$0xf] %v488
        %521 = vst [vmem:[%s215 + $0x34] sm:$0xf] %v489
        %522 = vst [vmem:[%s215 + $0x38] sm:$0xf] %v490
        %523 = vst [vmem:[%s215 + $0x3c] sm:$0xf] %v491
        %s524 = sand.u32 %s96, 1
        %s525 = scalar_lea.sflag [#allocation4], %s524
        %s526 = sand.u32 %s96, 1
        %s527 = smul.addr %s526, 64
        %s528 = scalar_lea.vmem [#allocation7], %s527
        // Predicated region
        $region37: #{tpu_custom_call.1} parent=27 // pred_check
          %p529 = pneg %p106
        $region38: #{tpu_custom_call.1} parent=27 // pred_check_branch
          %531 = sbr.rel (%p529) target = $region40
        $region39: #{tpu_custom_call.1} parent=27 // pred_region
          %s532 = smul.u32 16, %s27
          %s534 = ssub.s32 1024, 1024
          %535 = vsyncadd %s525, %s534
          %s536 = smul.addr %s26, 48
          %s537 = sadd.s32 %s532, %s536
          %s538 = smul.addr %s537, 64
          %s539 = scalar_lea.hbm %s2, %s538
          %s540 = sshll.u32 %s528, 4
          %s541 = int_to_ptr.vmem [resolvable:$true] %s540
          %546 = dma.vmem_to_hbm [thread:$0]  %s541, 1024, %s539, %s525, 64, 64, 4
        $region40: #{tpu_custom_call.1} parent=27 // pred_fallthru
          _
      $region28: #{tpu_custom_call.1} parent=5 // pred_fallthru
        _
      %p547 = scmp.le.s32.totalorder 2, %s17
      // Predicated region
      $region41: #{tpu_custom_call.1} parent=5 // pred_check
        %p548 = pneg %p547
      $region42: #{tpu_custom_call.1} parent=5 // pred_check_branch
        %550 = sbr.rel (%p548) target = $region44
      $region43: #{tpu_custom_call.1} parent=5 // pred_region
        %s551 = ssub.s32 %s17, 2
        // Predicated region
        $region45: #{tpu_custom_call.1} parent=43 // pred_check
          %p552 = pneg %p112
        $region46: #{tpu_custom_call.1} parent=43 // pred_check_branch
          %554 = sbr.rel (%p552) target = $region48
        $region47: #{tpu_custom_call.1} parent=43 // pred_region
          %s555 = sand.u32 %s97, 1
          %s556 = scalar_lea.sflag [#allocation4], %s555
          %s557 = sand.u32 %s97, 1
          %s558 = smul.addr %s557, 64
          %s559 = scalar_lea.vmem [#allocation7], %s558
          %560 = dma.done %s556, 1024
        $region48: #{tpu_custom_call.1} parent=43 // pred_fallthru
          _
      $region44: #{tpu_custom_call.1} parent=5 // pred_fallthru
        _
    $region6: #{tpu_custom_call.1} parent=1 // loop_footer
      %s21 = sadd.s32 1, %s17
    $region7: #{tpu_custom_call.1} parent=1 // loop_footer_branch
      %16 = sbr.rel target = $region3
    $region8: #{tpu_custom_call.1} parent=1 // loop_exit
      _
    %561 = vsyncpa [#allocation3], 1
    %s562 = scalar_lea.sflag [#allocation3], 1
    %563 = vsyncpa %s562, 1
    %564 = vsyncpa [#allocation6], 1
    %s565 = scalar_lea.sflag [#allocation6], 1
    %566 = vsyncpa %s565, 1
    %567 = vsyncpa [#allocation4], 1
    %s568 = scalar_lea.sflag [#allocation4], 1
    %569 = vsyncpa %s568, 1

</llo_original>
